<compile_context>
chip_gen: v7x
topology: tpu7x:2x2x1
jax: 0.10.0
libtpu: 0.0.40
codegen_flags: <defaults>
</compile_context>

<pallas_src>
import functools

import jax
import jax.numpy as jnp
from jax.experimental import pallas as pl
from jax.experimental.pallas import tpu as pltpu


def _row_stats_kernel(a_ref, p_ref, *rest, margin, num_negatives, feat_dim):
    """Per-anchor statistics for one batch tile.

    a_ref, p_ref : (tb, D)   anchor / positive rows (seq position 0 only, via BlockSpec)
    negatives    : K refs of (tb, D)  (lane-aligned fast path)  OR
                   1 ref  of (tb, K*D) (fallback; sliced in-kernel)
    s_neg_ref    : (tb, 1)   sum_k exp(cos(a, n_k) / margin)
    inv_pos_ref  : (tb, 1)   exp(-cos(a, p) / margin) == 1 / sim_pos
    """
    *n_refs, s_neg_ref, inv_pos_ref = rest
    eps = 1e-12                      # F.normalize default eps
    inv_margin = 1.0 / margin

    a = a_ref[...].astype(jnp.float32)       # (tb, D)
    p = p_ref[...].astype(jnp.float32)       # (tb, D)

    # Per-row 1 / max(||x||, eps): applied to the reduced dot products instead of
    # normalizing every element (exact F.normalize clamp semantics, far less VPU work).
    inv_a = 1.0 / jnp.maximum(jnp.sqrt(jnp.sum(a * a, axis=-1, keepdims=True)), eps)
    inv_p = 1.0 / jnp.maximum(jnp.sqrt(jnp.sum(p * p, axis=-1, keepdims=True)), eps)

    cos_pos = jnp.sum(a * p, axis=-1, keepdims=True) * inv_a * inv_p          # (tb, 1)
    inv_pos_ref[...] = jnp.exp(-cos_pos * inv_margin)                         # no reciprocal

    # Negatives: fully packed (tb, D) chunks, static unroll over K (K is tiny).
    if len(n_refs) == num_negatives:
        neg_chunks = [r[...].astype(jnp.float32) for r in n_refs]
    else:
        n_all = n_refs[0][...].astype(jnp.float32)                            # (tb, K*D)
        neg_chunks = [n_all[:, k * feat_dim:(k + 1) * feat_dim]
                      for k in range(num_negatives)]

    s = jnp.zeros_like(cos_pos)
    for nk in neg_chunks:
        inv_nk = 1.0 / jnp.maximum(jnp.sqrt(jnp.sum(nk * nk, axis=-1, keepdims=True)), eps)
        cos_k = jnp.sum(a * nk, axis=-1, keepdims=True) * (inv_a * inv_nk)    # (tb, 1)
        s = s + jnp.exp(cos_k * inv_margin)                                   # exp only on kept entries
    s_neg_ref[...] = s


def _pairwise_logmean_kernel(s_neg_ref, inv_row_ref, o_ref, acc_ref, *, inv_count):
    """mean_ij log(1 + s_neg[i] * inv_pos[j]) without materializing (B, B) in HBM.

    s_neg_ref   : (tbi, 1)   column block of s_neg
    inv_row_ref : (1,  B)    full lane-dense inv_pos row (constant across the grid)
    o_ref       : (1,  1)    final loss
    acc_ref     : (1,  B)    lane-dense VMEM partial-sum accumulator
    """
    i = pl.program_id(0)

    @pl.when(i == 0)
    def _():
        acc_ref[...] = jnp.zeros_like(acc_ref)

    # (tbi,1)*(1,B) -> (tbi,B) on the VPU.  Per step only a sublane reduction +
    # elementwise add into the lane-dense accumulator (no per-step scalar reduce,
    # no 1-lane masked read-modify-write).
    ratio = s_neg_ref[...] * inv_row_ref[...]
    acc_ref[...] += jnp.sum(jnp.log(1.0 + ratio), axis=0, keepdims=True)      # (1, B)

    @pl.when(i == pl.num_programs(0) - 1)
    def _():
        o_ref[...] = jnp.sum(acc_ref[...], axis=-1, keepdims=True) * inv_count


def _pick_tile(n, target, unit):
    """Largest divisor of n that is <= target and a multiple of `unit`; else n (full dim)."""
    target = max(unit, min(target, n))
    for cand in range(target, 0, -1):
        if n % cand == 0 and cand % unit == 0:
            return cand
    return n


def cosine_contrastive_loss(anchor, positive, negative, *, margin=0.5, num_negatives=3,
                            block_b=1024, block_i=512):
    """anchor, positive: (B, S, D); negative: (B*num_negatives, S, D)."""
    B, S, D = anchor.shape
    K = num_negatives
    assert negative.shape[0] == B * K, "negative must have B*num_negatives rows"
    assert positive.shape == anchor.shape and negative.shape[1:] == (S, D)

    # ---- Pass 1 tiling / VMEM budget (review #3/#4/#10) -------------------------------
    in_bytes = max(anchor.dtype.itemsize, negative.dtype.itemsize)
    # double-buffered input blocks ((2+K) windows of width D) + f32 working copies.
    per_row = (2 + K) * D * (2 * in_bytes + 4) + 128
    rows_cap = max(8, (28 * 1024 * 1024) // per_row)          # keep the working set well
    tb = _pick_tile(B, min(block_b, rows_cap), 8)             # under v7x's 64 MiB VMEM
    vmem1 = int(min(48 * 1024 * 1024, max(32 * 1024 * 1024, int(1.5 * per_row * tb))))

    # ---- Pass 1 operands: free row-major reshapes, seq-0 selected by the BlockSpec ----
    lane_aligned = (D % 128 == 0)
    if lane_aligned or S == 1:
        # (B, S, D) -> (B, S*D) is a pure metadata reshape; the (tb, D) column window
        # at offset 0 makes the kernel DMA read only the s=0 chunk of each row.
        a_in = anchor.reshape(B, S * D)
        p_in = positive.reshape(B, S * D)
    else:
        # TODO(synk): for S>1 with D not a multiple of 128 the column-window block is
        # not expressible under the (8,128) lane rule; fall back to one XLA compaction.
        a_in = anchor[:, 0, :]
        p_in = positive[:, 0, :]
    ap_spec = pl.BlockSpec((tb, D), lambda i: (i, 0))

    if lane_aligned:
        # (B*K, S, D) -> (B, K*S*D) free reshape; negative k for anchor row b lives at
        # columns [k*S*D, k*S*D + D).  Pass the same array K times with one 128-aligned
        # column-window BlockSpec per negative: no pre-slice copy, no sublane padding.
        n_in = negative.reshape(B, K * S * D)
        neg_args = [n_in] * K
        neg_specs = [pl.BlockSpec((tb, D), (lambda i, _c=k * S: (i, _c))) for k in range(K)]
    else:
        # Fallback: one lane-dense (B, K*D) operand (free reshape when S == 1, otherwise
        # a single XLA compaction), full-width block, per-k slicing inside the kernel.
        if S == 1:
            n_in = negative.reshape(B, K * D)
        else:
            n_in = negative[:, 0, :].reshape(B, K * D)  # TODO(synk): compaction copy
        neg_args = [n_in]
        neg_specs = [pl.BlockSpec((tb, K * D), lambda i: (i, 0))]

    # ---- Pass 1: per-row s_neg and 1/sim_pos (HBM-bandwidth bound, "parallel") --------
    s_neg, inv_pos = pl.pallas_call(
        functools.partial(_row_stats_kernel, margin=float(margin),
                          num_negatives=K, feat_dim=D),
        grid=(B // tb,),
        in_specs=[ap_spec, ap_spec] + neg_specs,
        out_specs=[
            pl.BlockSpec((tb, 1), lambda i: (i, 0)),
            pl.BlockSpec((tb, 1), lambda i: (i, 0)),
        ],
        out_shape=[
            jax.ShapeDtypeStruct((B, 1), jnp.float32),
            jax.ShapeDtypeStruct((B, 1), jnp.float32),
        ],
        compiler_params=pltpu.CompilerParams(
            dimension_semantics=("parallel",),      # megacore-shardable on v7x
            vmem_limit_bytes=vmem1,
        ),
    )(a_in, p_in, *neg_args)

    # TODO(synk): this (B,1)->(1,B) relayout of B*4 bytes is left to XLA between the two
    # pallas_calls; moving it in-kernel needs a degenerate (tb,1)->(1,tb) Mosaic transpose
    # whose support is shape-dependent, and it is negligible next to pass-1 traffic.
    inv_pos_row = inv_pos.reshape(1, B)

    # ---- Pass 2: mean over the PyTorch (B,B) broadcast (single step for typical B) ----
    rows_cap2 = max(8, (8 * 1024 * 1024) // (4 * B))          # cap the (tbi, B) log tile
    tbi = _pick_tile(B, min(block_i, rows_cap2), 8)
    # TODO(synk): for B >= ~8K on v7x, split this axis across the two TensorCores with
    # per-core partial accumulators instead of a single "arbitrary" accumulation.
    out = pl.pallas_call(
        functools.partial(_pairwise_logmean_kernel, inv_count=1.0 / float(B * B)),
        grid=(B // tbi,),
        in_specs=[
            pl.BlockSpec((tbi, 1), lambda i: (i, 0)),
            pl.BlockSpec((1, B), lambda i: (0, 0)),   # constant block: fetched once
        ],
        out_specs=pl.BlockSpec((1, 1), lambda i: (0, 0)),
        out_shape=jax.ShapeDtypeStruct((1, 1), jnp.float32),
        scratch_shapes=[pltpu.VMEM((1, B), jnp.float32)],
        compiler_params=pltpu.CompilerParams(
            dimension_semantics=("arbitrary",),
            vmem_limit_bytes=32 * 1024 * 1024,
        ),
    )(s_neg, inv_pos_row)
    return out[0, 0]


def _reference_loss(anchor, positive, negative, *, margin=0.5, num_negatives=3):
    """Pure-JAX port of the PyTorch forward (verification only)."""
    a = anchor[:, 0, :]
    p = positive[:, 0, :]
    n = negative[:, 0, :]

    def norm(x):
        return x / jnp.maximum(jnp.linalg.norm(x, axis=-1, keepdims=True), 1e-12)

    a, p, n = norm(a), norm(p), norm(n)
    sim_pos = jnp.exp(jnp.sum(a * p, axis=-1) / margin)                              # (B,)
    n_kbd = jnp.transpose(n.reshape(-1, num_negatives, n.shape[-1]), (1, 0, 2))      # (K,B,D)
    sim_neg = jnp.sum(a[None] * n_kbd, axis=-1) / margin                             # (K,B)
    sim_neg = jnp.sum(jnp.exp(sim_neg), axis=0, keepdims=True).T                     # (B,1)
    return jnp.mean(jnp.log(1.0 + sim_neg / sim_pos))                                # (B,1)/(B,) -> (B,B)


if __name__ == "__main__":
    B, S, D, K = 64, 2, 128, 3
    key = jax.random.PRNGKey(0)
    ka, kp, kn = jax.random.split(key, 3)
    anchor = jax.random.normal(ka, (B, S, D), dtype=jnp.float32)
    positive = jax.random.normal(kp, (B, S, D), dtype=jnp.float32)
    negative = jax.random.normal(kn, (B * K, S, D), dtype=jnp.float32)

    ref = _reference_loss(anchor, positive, negative, margin=0.5, num_negatives=K)

    # Default (roofline-sized) tiles: single-step grids at this small B.
    loss = cosine_contrastive_loss(anchor, positive, negative, margin=0.5, num_negatives=K)
    loss = jax.block_until_ready(loss)
    assert jnp.allclose(loss, ref, rtol=1e-5, atol=1e-5), (loss, ref)

    # Small tiles: exercises the multi-step pipelined grids and the pass-2 accumulator.
    loss_small = cosine_contrastive_loss(anchor, positive, negative, margin=0.5,
                                         num_negatives=K, block_b=16, block_i=16)
    loss_small = jax.block_until_ready(loss_small)
    assert jnp.allclose(loss_small, ref, rtol=1e-5, atol=1e-5), (loss_small, ref)

    print("KERNEL_OK")
</pallas_src>

<mosaic_0001>
module attributes {stable_mosaic.version = 11 : i64} {
  func.func @_row_stats_kernel(%arg0: i32, %arg1: memref<64x128xf32, #tpu.memory_space<vmem>>, %arg2: memref<64x128xf32, #tpu.memory_space<vmem>>, %arg3: memref<64x128xf32, #tpu.memory_space<vmem>>, %arg4: memref<64x128xf32, #tpu.memory_space<vmem>>, %arg5: memref<64x128xf32, #tpu.memory_space<vmem>>, %arg6: memref<64x1xf32, #tpu.memory_space<vmem>>, %arg7: memref<64x1xf32, #tpu.memory_space<vmem>>) attributes {dimension_semantics = [#tpu.dimension_semantics<parallel>], iteration_bounds = array<i64: 1>, scalar_prefetch = 0 : i64, scratch_operands = 0 : i64, tpu.core_type = #tpu.core_type<tc>, window_params = [{transform_indices = @transform_0, window_bounds = array<i64: 64, 128>}, {transform_indices = @transform_1, window_bounds = array<i64: 64, 128>}, {transform_indices = @transform_2, window_bounds = array<i64: 64, 128>}, {transform_indices = @transform_3, window_bounds = array<i64: 64, 128>}, {transform_indices = @transform_4, window_bounds = array<i64: 64, 128>}, {transform_indices = @transform_5, window_bounds = array<i64: 64, 1>}, {transform_indices = @transform_6, window_bounds = array<i64: 64, 1>}]} {
    %c0 = arith.constant 0 : index
    %c0_0 = arith.constant 0 : index
    %0 = vector.load %arg1[%c0, %c0_0] : memref<64x128xf32, #tpu.memory_space<vmem>>, vector<64x128xf32>
    %c0_1 = arith.constant 0 : index
    %c0_2 = arith.constant 0 : index
    %1 = vector.load %arg2[%c0_1, %c0_2] : memref<64x128xf32, #tpu.memory_space<vmem>>, vector<64x128xf32>
    %2 = arith.mulf %0, %0 : vector<64x128xf32>
    %cst = arith.constant dense<0.000000e+00> : vector<64xf32>
    %3 = vector.multi_reduction <add>, %2, %cst [1] : vector<64x128xf32> to vector<64xf32>
    %4 = vector.shape_cast %3 : vector<64xf32> to vector<64x1xf32>
    %5 = math.sqrt %4 : vector<64x1xf32>
    %cst_3 = arith.constant 9.99999996E-13 : f32
    %6 = vector.broadcast %cst_3 : f32 to vector<64x1xf32>
    %7 = arith.maximumf %5, %6 : vector<64x1xf32>
    %cst_4 = arith.constant 1.000000e+00 : f32
    %8 = vector.broadcast %cst_4 : f32 to vector<64x1xf32>
    %9 = arith.divf %8, %7 : vector<64x1xf32>
    %10 = arith.mulf %1, %1 : vector<64x128xf32>
    %cst_5 = arith.constant dense<0.000000e+00> : vector<64xf32>
    %11 = vector.multi_reduction <add>, %10, %cst_5 [1] : vector<64x128xf32> to vector<64xf32>
    %12 = vector.shape_cast %11 : vector<64xf32> to vector<64x1xf32>
    %13 = math.sqrt %12 : vector<64x1xf32>
    %cst_6 = arith.constant 9.99999996E-13 : f32
    %14 = vector.broadcast %cst_6 : f32 to vector<64x1xf32>
    %15 = arith.maximumf %13, %14 : vector<64x1xf32>
    %cst_7 = arith.constant 1.000000e+00 : f32
    %16 = vector.broadcast %cst_7 : f32 to vector<64x1xf32>
    %17 = arith.divf %16, %15 : vector<64x1xf32>
    %18 = arith.mulf %0, %1 : vector<64x128xf32>
    %cst_8 = arith.constant dense<0.000000e+00> : vector<64xf32>
    %19 = vector.multi_reduction <add>, %18, %cst_8 [1] : vector<64x128xf32> to vector<64xf32>
    %20 = vector.shape_cast %19 : vector<64xf32> to vector<64x1xf32>
    %21 = arith.mulf %20, %9 : vector<64x1xf32>
    %22 = arith.mulf %21, %17 : vector<64x1xf32>
    %cst_9 = arith.constant 0.000000e+00 : f32
    %23 = vector.broadcast %cst_9 : f32 to vector<64x1xf32>
    %24 = arith.subf %23, %22 : vector<64x1xf32>
    %cst_10 = arith.constant 2.000000e+00 : f32
    %25 = vector.broadcast %cst_10 : f32 to vector<64x1xf32>
    %26 = arith.mulf %24, %25 : vector<64x1xf32>
    %27 = math.exp %26 : vector<64x1xf32>
    %c0_11 = arith.constant 0 : index
    %c0_12 = arith.constant 0 : index
    %28 = vector.load %arg7[%c0_11, %c0_12] : memref<64x1xf32, #tpu.memory_space<vmem>>, vector<64x1xf32>
    tpu.vector_store %arg7[%c0_11, %c0_12], %27 {strides = array<i32>} : memref<64x1xf32, #tpu.memory_space<vmem>>, vector<64x1xf32>,
    %c0_13 = arith.constant 0 : index
    %c0_14 = arith.constant 0 : index
    %29 = vector.load %arg3[%c0_13, %c0_14] : memref<64x128xf32, #tpu.memory_space<vmem>>, vector<64x128xf32>
    %c0_15 = arith.constant 0 : index
    %c0_16 = arith.constant 0 : index
    %30 = vector.load %arg4[%c0_15, %c0_16] : memref<64x128xf32, #tpu.memory_space<vmem>>, vector<64x128xf32>
    %c0_17 = arith.constant 0 : index
    %c0_18 = arith.constant 0 : index
    %31 = vector.load %arg5[%c0_17, %c0_18] : memref<64x128xf32, #tpu.memory_space<vmem>>, vector<64x128xf32>
    %cst_19 = arith.constant 0.000000e+00 : f32
    %32 = vector.broadcast %cst_19 : f32 to vector<64x1xf32>
    %33 = arith.mulf %29, %29 : vector<64x128xf32>
    %cst_20 = arith.constant dense<0.000000e+00> : vector<64xf32>
    %34 = vector.multi_reduction <add>, %33, %cst_20 [1] : vector<64x128xf32> to vector<64xf32>
    %35 = vector.shape_cast %34 : vector<64xf32> to vector<64x1xf32>
    %36 = math.sqrt %35 : vector<64x1xf32>
    %cst_21 = arith.constant 9.99999996E-13 : f32
    %37 = vector.broadcast %cst_21 : f32 to vector<64x1xf32>
    %38 = arith.maximumf %36, %37 : vector<64x1xf32>
    %cst_22 = arith.constant 1.000000e+00 : f32
    %39 = vector.broadcast %cst_22 : f32 to vector<64x1xf32>
    %40 = arith.divf %39, %38 : vector<64x1xf32>
    %41 = arith.mulf %0, %29 : vector<64x128xf32>
    %cst_23 = arith.constant dense<0.000000e+00> : vector<64xf32>
    %42 = vector.multi_reduction <add>, %41, %cst_23 [1] : vector<64x128xf32> to vector<64xf32>
    %43 = vector.shape_cast %42 : vector<64xf32> to vector<64x1xf32>
    %44 = arith.mulf %9, %40 : vector<64x1xf32>
    %45 = arith.mulf %43, %44 : vector<64x1xf32>
    %cst_24 = arith.constant 2.000000e+00 : f32
    %46 = vector.broadcast %cst_24 : f32 to vector<64x1xf32>
    %47 = arith.mulf %45, %46 : vector<64x1xf32>
    %48 = math.exp %47 : vector<64x1xf32>
    %49 = arith.addf %32, %48 : vector<64x1xf32>
    %50 = arith.mulf %30, %30 : vector<64x128xf32>
    %cst_25 = arith.constant dense<0.000000e+00> : vector<64xf32>
    %51 = vector.multi_reduction <add>, %50, %cst_25 [1] : vector<64x128xf32> to vector<64xf32>
    %52 = vector.shape_cast %51 : vector<64xf32> to vector<64x1xf32>
    %53 = math.sqrt %52 : vector<64x1xf32>
    %cst_26 = arith.constant 9.99999996E-13 : f32
    %54 = vector.broadcast %cst_26 : f32 to vector<64x1xf32>
    %55 = arith.maximumf %53, %54 : vector<64x1xf32>
    %cst_27 = arith.constant 1.000000e+00 : f32
    %56 = vector.broadcast %cst_27 : f32 to vector<64x1xf32>
    %57 = arith.divf %56, %55 : vector<64x1xf32>
    %58 = arith.mulf %0, %30 : vector<64x128xf32>
    %cst_28 = arith.constant dense<0.000000e+00> : vector<64xf32>
    %59 = vector.multi_reduction <add>, %58, %cst_28 [1] : vector<64x128xf32> to vector<64xf32>
    %60 = vector.shape_cast %59 : vector<64xf32> to vector<64x1xf32>
    %61 = arith.mulf %9, %57 : vector<64x1xf32>
    %62 = arith.mulf %60, %61 : vector<64x1xf32>
    %cst_29 = arith.constant 2.000000e+00 : f32
    %63 = vector.broadcast %cst_29 : f32 to vector<64x1xf32>
    %64 = arith.mulf %62, %63 : vector<64x1xf32>
    %65 = math.exp %64 : vector<64x1xf32>
    %66 = arith.addf %49, %65 : vector<64x1xf32>
    %67 = arith.mulf %31, %31 : vector<64x128xf32>
    %cst_30 = arith.constant dense<0.000000e+00> : vector<64xf32>
    %68 = vector.multi_reduction <add>, %67, %cst_30 [1] : vector<64x128xf32> to vector<64xf32>
    %69 = vector.shape_cast %68 : vector<64xf32> to vector<64x1xf32>
    %70 = math.sqrt %69 : vector<64x1xf32>
    %cst_31 = arith.constant 9.99999996E-13 : f32
    %71 = vector.broadcast %cst_31 : f32 to vector<64x1xf32>
    %72 = arith.maximumf %70, %71 : vector<64x1xf32>
    %cst_32 = arith.constant 1.000000e+00 : f32
    %73 = vector.broadcast %cst_32 : f32 to vector<64x1xf32>
    %74 = arith.divf %73, %72 : vector<64x1xf32>
    %75 = arith.mulf %0, %31 : vector<64x128xf32>
    %cst_33 = arith.constant dense<0.000000e+00> : vector<64xf32>
    %76 = vector.multi_reduction <add>, %75, %cst_33 [1] : vector<64x128xf32> to vector<64xf32>
    %77 = vector.shape_cast %76 : vector<64xf32> to vector<64x1xf32>
    %78 = arith.mulf %9, %74 : vector<64x1xf32>
    %79 = arith.mulf %77, %78 : vector<64x1xf32>
    %cst_34 = arith.constant 2.000000e+00 : f32
    %80 = vector.broadcast %cst_34 : f32 to vector<64x1xf32>
    %81 = arith.mulf %79, %80 : vector<64x1xf32>
    %82 = math.exp %81 : vector<64x1xf32>
    %83 = arith.addf %66, %82 : vector<64x1xf32>
    %c0_35 = arith.constant 0 : index
    %c0_36 = arith.constant 0 : index
    %84 = vector.load %arg6[%c0_35, %c0_36] : memref<64x1xf32, #tpu.memory_space<vmem>>, vector<64x1xf32>
    tpu.vector_store %arg6[%c0_35, %c0_36], %83 {strides = array<i32>} : memref<64x1xf32, #tpu.memory_space<vmem>>, vector<64x1xf32>,
    return
  }
  func.func @transform_0(%arg0: i32) -> (i32, i32) {
    %c0_i32 = arith.constant 0 : i32
    %c0_i32_0 = arith.constant 0 : i32
    return %arg0, %c0_i32 : i32, i32
  }
  func.func @transform_1(%arg0: i32) -> (i32, i32) {
    %c0_i32 = arith.constant 0 : i32
    %c0_i32_0 = arith.constant 0 : i32
    return %arg0, %c0_i32 : i32, i32
  }
  func.func @transform_2(%arg0: i32) -> (i32, i32) {
    %c0_i32 = arith.constant 0 : i32
    %c0_i32_0 = arith.constant 0 : i32
    return %arg0, %c0_i32 : i32, i32
  }
  func.func @transform_3(%arg0: i32) -> (i32, i32) {
    %c2_i32 = arith.constant 2 : i32
    %c0_i32 = arith.constant 0 : i32
    return %arg0, %c2_i32 : i32, i32
  }
  func.func @transform_4(%arg0: i32) -> (i32, i32) {
    %c4_i32 = arith.constant 4 : i32
    %c0_i32 = arith.constant 0 : i32
    return %arg0, %c4_i32 : i32, i32
  }
  func.func @transform_5(%arg0: i32) -> (i32, i32) {
    %c0_i32 = arith.constant 0 : i32
    %c0_i32_0 = arith.constant 0 : i32
    return %arg0, %c0_i32 : i32, i32
  }
  func.func @transform_6(%arg0: i32) -> (i32, i32) {
    %c0_i32 = arith.constant 0 : i32
    %c0_i32_0 = arith.constant 0 : i32
    return %arg0, %c0_i32 : i32, i32
  }
}

</mosaic_0001>

<llo_original>
// kernel: tpu_custom_call.1
$region0: #{tpu_custom_call.1}
  #allocation0 [shape = 'u32[]', space=smem, size = 0x4, offset = 0x4, fixed_abs, tag = 'smem constant byte address 0x4 - core index']
  #allocation1 [shape = 'u32[144,128]{1,0:T(1,128)}', space=vmem, size = 0x12000, scoped, tag = 'internal scratch']
  %s0 = inlined_call_operand.hbm [shape: f32[64,256], index: 0, kind: input, shape index: {}]
  %s1 = inlined_call_operand.hbm [shape: f32[64,256], index: 1, kind: input, shape index: {}]
  %s2 = inlined_call_operand.hbm [shape: f32[64,768], index: 2, kind: input, shape index: {}]
  %s3 = inlined_call_operand.hbm [shape: f32[64,768], index: 3, kind: input, shape index: {}]
  %s4 = inlined_call_operand.hbm [shape: f32[64,768], index: 4, kind: input, shape index: {}]
  %s5 = inlined_call_operand.vmem [shape: f32[64,1], index: 5, kind: output, shape index: {0}]
  %s6 = inlined_call_operand.vmem [shape: f32[64,1], index: 6, kind: output, shape index: {1}]
  %7 = xla_tuple %s5, %s6
  %s8 = sld [smem:[#allocation0]]
  $region58: #{tpu_custom_call.1} parent=0
    _
  %s10 = ssub.s32 1, %s8
  %s11 = scalar_select 0, %s10, %s8
  $region1: #{tpu_custom_call.1} parent=0
    #allocation2 [shape = 'u8[32768]{0}', space=vmem, size = 0x8000, scoped, tag = 'input window, operand 0, single buffered']
    #allocation3 [shape = 's32[1]{0}', space=sflag, size = 0x4, scoped, tag = 'scoped memory for tpu_custom_call.1']
    #allocation4 [shape = 'u8[32768]{0}', space=vmem, size = 0x8000, scoped, tag = 'input window, operand 1, single buffered']
    #allocation5 [shape = 's32[1]{0}', space=sflag, size = 0x4, scoped, tag = 'scoped memory for tpu_custom_call.1']
    #allocation6 [shape = 'u8[32768]{0}', space=vmem, size = 0x8000, scoped, tag = 'input window, operand 2, single buffered']
    #allocation7 [shape = 'u8[32768]{0}', space=vmem, size = 0x8000, scoped, tag = 'input window, operand 3, single buffered']
    #allocation8 [shape = 's32[1]{0}', space=sflag, size = 0x4, scoped, tag = 'scoped memory for tpu_custom_call.1']
    #allocation9 [shape = 'u8[32768]{0}', space=vmem, size = 0x8000, scoped, tag = 'input window, operand 4, single buffered']
    %12 = vsyncpa [#allocation3], 0
    %13 = vsyncpa [#allocation5], 0
    %14 = vsyncpa [#allocation8], 0
    // Predicated region
    $region2: #{tpu_custom_call.1} parent=1 // pred_check
      _
    $region3: #{tpu_custom_call.1} parent=1 // pred_check_branch
      %16 = sbr.rel (0) target = $region5
    $region4: #{tpu_custom_call.1} parent=1 // pred_region
      %s18 = ssub.s32 1024, 1024
      %19 = vsyncadd [#allocation3], %s18
      %s20 = sshll.u32 [#allocation2], 4
      %s21 = int_to_ptr.vmem [resolvable:$true] %s20
      %26 = dma.hbm_to_vmem [thread:$0]  %s0, 1024, %s21, [#allocation3], 256, 128, 8
    $region5: #{tpu_custom_call.1} parent=1 // pred_fallthru
      _
    // Predicated region
    $region6: #{tpu_custom_call.1} parent=1 // pred_check
      _
    $region7: #{tpu_custom_call.1} parent=1 // pred_check_branch
      %28 = sbr.rel (0) target = $region9
    $region8: #{tpu_custom_call.1} parent=1 // pred_region
      %s30 = ssub.s32 1024, 1024
      %31 = vsyncadd [#allocation5], %s30
      %s32 = sshll.u32 [#allocation4], 4
      %s33 = int_to_ptr.vmem [resolvable:$true] %s32
      %38 = dma.hbm_to_vmem [thread:$0]  %s1, 1024, %s33, [#allocation5], 256, 128, 8
    $region9: #{tpu_custom_call.1} parent=1 // pred_fallthru
      _
    // Predicated region
    $region10: #{tpu_custom_call.1} parent=1 // pred_check
      _
    $region11: #{tpu_custom_call.1} parent=1 // pred_check_branch
      %40 = sbr.rel (0) target = $region13
    $region12: #{tpu_custom_call.1} parent=1 // pred_region
      %s42 = ssub.s32 1024, 1024
      %43 = vsyncadd [#allocation5], %s42
      %s44 = sshll.u32 [#allocation6], 4
      %s45 = int_to_ptr.vmem [resolvable:$true] %s44
      %50 = dma.hbm_to_vmem [thread:$0]  %s2, 1024, %s45, [#allocation5], 768, 128, 8
    $region13: #{tpu_custom_call.1} parent=1 // pred_fallthru
      _
    // Predicated region
    $region14: #{tpu_custom_call.1} parent=1 // pred_check
      _
    $region15: #{tpu_custom_call.1} parent=1 // pred_check_branch
      %52 = sbr.rel (0) target = $region17
    $region16: #{tpu_custom_call.1} parent=1 // pred_region
      %s54 = ssub.s32 1024, 1024
      %55 = vsyncadd [#allocation8], %s54
      %s56 = scalar_lea.hbm %s3, 256
      %s57 = sshll.u32 [#allocation7], 4
      %s58 = int_to_ptr.vmem [resolvable:$true] %s57
      %63 = dma.hbm_to_vmem [thread:$0]  %s56, 1024, %s58, [#allocation8], 768, 128, 8
    $region17: #{tpu_custom_call.1} parent=1 // pred_fallthru
      _
    // Predicated region
    $region18: #{tpu_custom_call.1} parent=1 // pred_check
      _
    $region19: #{tpu_custom_call.1} parent=1 // pred_check_branch
      %65 = sbr.rel (0) target = $region21
    $region20: #{tpu_custom_call.1} parent=1 // pred_region
      %s67 = ssub.s32 1024, 1024
      %68 = vsyncadd [#allocation8], %s67
      %s69 = scalar_lea.hbm %s4, 512
      %s70 = sshll.u32 [#allocation9], 4
      %s71 = int_to_ptr.vmem [resolvable:$true] %s70
      %76 = dma.hbm_to_vmem [thread:$0]  %s69, 1024, %s71, [#allocation8], 768, 128, 8
    $region21: #{tpu_custom_call.1} parent=1 // pred_fallthru
      _
    // Predicated region
    $region22: #{tpu_custom_call.1} parent=1 // pred_check
      _
    $region23: #{tpu_custom_call.1} parent=1 // pred_check_branch
      %78 = sbr.rel (0) target = $region25
    $region24: #{tpu_custom_call.1} parent=1 // pred_region
      %79 = dma.done [#allocation3], 1024
    $region25: #{tpu_custom_call.1} parent=1 // pred_fallthru
      _
    // Predicated region
    $region26: #{tpu_custom_call.1} parent=1 // pred_check
      _
    $region27: #{tpu_custom_call.1} parent=1 // pred_check_branch
      %81 = sbr.rel (0) target = $region29
    $region28: #{tpu_custom_call.1} parent=1 // pred_region
      %82 = dma.done [#allocation5], 1024
    $region29: #{tpu_custom_call.1} parent=1 // pred_fallthru
      _
    // Predicated region
    $region30: #{tpu_custom_call.1} parent=1 // pred_check
      _
    $region31: #{tpu_custom_call.1} parent=1 // pred_check_branch
      %84 = sbr.rel (0) target = $region33
    $region32: #{tpu_custom_call.1} parent=1 // pred_region
      %85 = dma.done [#allocation5], 1024
    $region33: #{tpu_custom_call.1} parent=1 // pred_fallthru
      _
    // Predicated region
    $region34: #{tpu_custom_call.1} parent=1 // pred_check
      _
    $region35: #{tpu_custom_call.1} parent=1 // pred_check_branch
      %87 = sbr.rel (0) target = $region37
    $region36: #{tpu_custom_call.1} parent=1 // pred_region
      %88 = dma.done [#allocation8], 1024
    $region37: #{tpu_custom_call.1} parent=1 // pred_fallthru
      _
    // Predicated region
    $region38: #{tpu_custom_call.1} parent=1 // pred_check
      _
    $region39: #{tpu_custom_call.1} parent=1 // pred_check_branch
      %90 = sbr.rel (0) target = $region41
    $region40: #{tpu_custom_call.1} parent=1 // pred_region
      %91 = dma.done [#allocation8], 1024
    $region41: #{tpu_custom_call.1} parent=1 // pred_fallthru
      _
    %v92 = vld [vmem:[#allocation2] sm:$0xff]
    %v93 = vld [vmem:[#allocation2 + $0x8] sm:$0xff]
    %v94 = vld [vmem:[#allocation2 + $0x10] sm:$0xff]
    %v95 = vld [vmem:[#allocation2 + $0x18] sm:$0xff]
    %v96 = vld [vmem:[#allocation2 + $0x20] sm:$0xff]
    %v97 = vld [vmem:[#allocation2 + $0x28] sm:$0xff]
    %v98 = vld [vmem:[#allocation2 + $0x30] sm:$0xff]
    %v99 = vld [vmem:[#allocation2 + $0x38] sm:$0xff]
    %v100 = vld [vmem:[#allocation4] sm:$0xff]
    %v101 = vld [vmem:[#allocation4 + $0x8] sm:$0xff]
    %v102 = vld [vmem:[#allocation4 + $0x10] sm:$0xff]
    %v103 = vld [vmem:[#allocation4 + $0x18] sm:$0xff]
    %v104 = vld [vmem:[#allocation4 + $0x20] sm:$0xff]
    %v105 = vld [vmem:[#allocation4 + $0x28] sm:$0xff]
    %v106 = vld [vmem:[#allocation4 + $0x30] sm:$0xff]
    %v107 = vld [vmem:[#allocation4 + $0x38] sm:$0xff]
    %v108 = vmul.f32 %v92, %v92
    %v109 = vmul.f32 %v93, %v93
    %v110 = vmul.f32 %v94, %v94
    %v111 = vmul.f32 %v95, %v95
    %v112 = vmul.f32 %v96, %v96
    %v113 = vmul.f32 %v97, %v97
    %v114 = vmul.f32 %v98, %v98
    %v115 = vmul.f32 %v99, %v99
    %116 = vadd.xlane.f32.xlu0 %v108
    %v117 = vpop.xlane.xlu0 %116
    %118 = vadd.xlane.f32.xlu0 %v109
    %v119 = vpop.xlane.xlu0 %118
    %120 = vadd.xlane.f32.xlu0 %v110
    %v121 = vpop.xlane.xlu0 %120
    %122 = vadd.xlane.f32.xlu0 %v111
    %v123 = vpop.xlane.xlu0 %122
    %124 = vadd.xlane.f32.xlu0 %v112
    %v125 = vpop.xlane.xlu0 %124
    %126 = vadd.xlane.f32.xlu0 %v113
    %v127 = vpop.xlane.xlu0 %126
    %128 = vadd.xlane.f32.xlu0 %v114
    %v129 = vpop.xlane.xlu0 %128
    %130 = vadd.xlane.f32.xlu0 %v115
    %v131 = vpop.xlane.xlu0 %130
    %v132 = vrsqrt.pop %v117
    %v133 = vmul.f32 %v117, %v132
    %vm134 = vcmp.eq.f32.partialorder %v117, inf
    %v135 = vsel %vm134, %v117, %v133
    %vm136 = vcmp.eq.f32.partialorder %v117, 0.0
    %v137 = vand.u32 %v117, 2147483648
    %v138 = vsel %vm136, %v137, %v135
    %v139 = vrsqrt.pop %v119
    %v140 = vmul.f32 %v119, %v139
    %vm141 = vcmp.eq.f32.partialorder %v119, inf
    %v142 = vsel %vm141, %v119, %v140
    %vm143 = vcmp.eq.f32.partialorder %v119, 0.0
    %v144 = vand.u32 %v119, 2147483648
    %v145 = vsel %vm143, %v144, %v142
    %v146 = vrsqrt.pop %v121
    %v147 = vmul.f32 %v121, %v146
    %vm148 = vcmp.eq.f32.partialorder %v121, inf
    %v149 = vsel %vm148, %v121, %v147
    %vm150 = vcmp.eq.f32.partialorder %v121, 0.0
    %v151 = vand.u32 %v121, 2147483648
    %v152 = vsel %vm150, %v151, %v149
    %v153 = vrsqrt.pop %v123
    %v154 = vmul.f32 %v123, %v153
    %vm155 = vcmp.eq.f32.partialorder %v123, inf
    %v156 = vsel %vm155, %v123, %v154
    %vm157 = vcmp.eq.f32.partialorder %v123, 0.0
    %v158 = vand.u32 %v123, 2147483648
    %v159 = vsel %vm157, %v158, %v156
    %v160 = vrsqrt.pop %v125
    %v161 = vmul.f32 %v125, %v160
    %vm162 = vcmp.eq.f32.partialorder %v125, inf
    %v163 = vsel %vm162, %v125, %v161
    %vm164 = vcmp.eq.f32.partialorder %v125, 0.0
    %v165 = vand.u32 %v125, 2147483648
    %v166 = vsel %vm164, %v165, %v163
    %v167 = vrsqrt.pop %v127
    %v168 = vmul.f32 %v127, %v167
    %vm169 = vcmp.eq.f32.partialorder %v127, inf
    %v170 = vsel %vm169, %v127, %v168
    %vm171 = vcmp.eq.f32.partialorder %v127, 0.0
    %v172 = vand.u32 %v127, 2147483648
    %v173 = vsel %vm171, %v172, %v170
    %v174 = vrsqrt.pop %v129
    %v175 = vmul.f32 %v129, %v174
    %vm176 = vcmp.eq.f32.partialorder %v129, inf
    %v177 = vsel %vm176, %v129, %v175
    %vm178 = vcmp.eq.f32.partialorder %v129, 0.0
    %v179 = vand.u32 %v129, 2147483648
    %v180 = vsel %vm178, %v179, %v177
    %v181 = vrsqrt.pop %v131
    %v182 = vmul.f32 %v131, %v181
    %vm183 = vcmp.eq.f32.partialorder %v131, inf
    %v184 = vsel %vm183, %v131, %v182
    %vm185 = vcmp.eq.f32.partialorder %v131, 0.0
    %v186 = vand.u32 %v131, 2147483648
    %v187 = vsel %vm185, %v186, %v184
    %v188 = vmax.f32 %v138, 1e-12
    %v189 = vmax.f32 %v145, 1e-12
    %v190 = vmax.f32 %v152, 1e-12
    %v191 = vmax.f32 %v159, 1e-12
    %v192 = vmax.f32 %v166, 1e-12
    %v193 = vmax.f32 %v173, 1e-12
    %v194 = vmax.f32 %v180, 1e-12
    %v195 = vmax.f32 %v187, 1e-12
    %v196 = vrcp.pop %v188
    %v197 = vmul.f32 1.0, %v196
    %v198 = vrcp.pop %v189
    %v199 = vmul.f32 1.0, %v198
    %v200 = vrcp.pop %v190
    %v201 = vmul.f32 1.0, %v200
    %v202 = vrcp.pop %v191
    %v203 = vmul.f32 1.0, %v202
    %v204 = vrcp.pop %v192
    %v205 = vmul.f32 1.0, %v204
    %v206 = vrcp.pop %v193
    %v207 = vmul.f32 1.0, %v206
    %v208 = vrcp.pop %v194
    %v209 = vmul.f32 1.0, %v208
    %v210 = vrcp.pop %v195
    %v211 = vmul.f32 1.0, %v210
    %v212 = vmul.f32 %v100, %v100
    %v213 = vmul.f32 %v101, %v101
    %v214 = vmul.f32 %v102, %v102
    %v215 = vmul.f32 %v103, %v103
    %v216 = vmul.f32 %v104, %v104
    %v217 = vmul.f32 %v105, %v105
    %v218 = vmul.f32 %v106, %v106
    %v219 = vmul.f32 %v107, %v107
    %220 = vadd.xlane.f32.xlu0 %v212
    %v221 = vpop.xlane.xlu0 %220
    %222 = vadd.xlane.f32.xlu0 %v213
    %v223 = vpop.xlane.xlu0 %222
    %224 = vadd.xlane.f32.xlu0 %v214
    %v225 = vpop.xlane.xlu0 %224
    %226 = vadd.xlane.f32.xlu0 %v215
    %v227 = vpop.xlane.xlu0 %226
    %228 = vadd.xlane.f32.xlu0 %v216
    %v229 = vpop.xlane.xlu0 %228
    %230 = vadd.xlane.f32.xlu0 %v217
    %v231 = vpop.xlane.xlu0 %230
    %232 = vadd.xlane.f32.xlu0 %v218
    %v233 = vpop.xlane.xlu0 %232
    %234 = vadd.xlane.f32.xlu0 %v219
    %v235 = vpop.xlane.xlu0 %234
    %v236 = vrsqrt.pop %v221
    %v237 = vmul.f32 %v221, %v236
    %vm238 = vcmp.eq.f32.partialorder %v221, inf
    %v239 = vsel %vm238, %v221, %v237
    %vm240 = vcmp.eq.f32.partialorder %v221, 0.0
    %v241 = vand.u32 %v221, 2147483648
    %v242 = vsel %vm240, %v241, %v239
    %v243 = vrsqrt.pop %v223
    %v244 = vmul.f32 %v223, %v243
    %vm245 = vcmp.eq.f32.partialorder %v223, inf
    %v246 = vsel %vm245, %v223, %v244
    %vm247 = vcmp.eq.f32.partialorder %v223, 0.0
    %v248 = vand.u32 %v223, 2147483648
    %v249 = vsel %vm247, %v248, %v246
    %v250 = vrsqrt.pop %v225
    %v251 = vmul.f32 %v225, %v250
    %vm252 = vcmp.eq.f32.partialorder %v225, inf
    %v253 = vsel %vm252, %v225, %v251
    %vm254 = vcmp.eq.f32.partialorder %v225, 0.0
    %v255 = vand.u32 %v225, 2147483648
    %v256 = vsel %vm254, %v255, %v253
    %v257 = vrsqrt.pop %v227
    %v258 = vmul.f32 %v227, %v257
    %vm259 = vcmp.eq.f32.partialorder %v227, inf
    %v260 = vsel %vm259, %v227, %v258
    %vm261 = vcmp.eq.f32.partialorder %v227, 0.0
    %v262 = vand.u32 %v227, 2147483648
    %v263 = vsel %vm261, %v262, %v260
    %v264 = vrsqrt.pop %v229
    %v265 = vmul.f32 %v229, %v264
    %vm266 = vcmp.eq.f32.partialorder %v229, inf
    %v267 = vsel %vm266, %v229, %v265
    %vm268 = vcmp.eq.f32.partialorder %v229, 0.0
    %v269 = vand.u32 %v229, 2147483648
    %v270 = vsel %vm268, %v269, %v267
    %v271 = vrsqrt.pop %v231
    %v272 = vmul.f32 %v231, %v271
    %vm273 = vcmp.eq.f32.partialorder %v231, inf
    %v274 = vsel %vm273, %v231, %v272
    %vm275 = vcmp.eq.f32.partialorder %v231, 0.0
    %v276 = vand.u32 %v231, 2147483648
    %v277 = vsel %vm275, %v276, %v274
    %v278 = vrsqrt.pop %v233
    %v279 = vmul.f32 %v233, %v278
    %vm280 = vcmp.eq.f32.partialorder %v233, inf
    %v281 = vsel %vm280, %v233, %v279
    %vm282 = vcmp.eq.f32.partialorder %v233, 0.0
    %v283 = vand.u32 %v233, 2147483648
    %v284 = vsel %vm282, %v283, %v281
    %v285 = vrsqrt.pop %v235
    %v286 = vmul.f32 %v235, %v285
    %vm287 = vcmp.eq.f32.partialorder %v235, inf
    %v288 = vsel %vm287, %v235, %v286
    %vm289 = vcmp.eq.f32.partialorder %v235, 0.0
    %v290 = vand.u32 %v235, 2147483648
    %v291 = vsel %vm289, %v290, %v288
    %v292 = vmax.f32 %v242, 1e-12
    %v293 = vmax.f32 %v249, 1e-12
    %v294 = vmax.f32 %v256, 1e-12
    %v295 = vmax.f32 %v263, 1e-12
    %v296 = vmax.f32 %v270, 1e-12
    %v297 = vmax.f32 %v277, 1e-12
    %v298 = vmax.f32 %v284, 1e-12
    %v299 = vmax.f32 %v291, 1e-12
    %v300 = vrcp.pop %v292
    %v301 = vmul.f32 1.0, %v300
    %v302 = vrcp.pop %v293
    %v303 = vmul.f32 1.0, %v302
    %v304 = vrcp.pop %v294
    %v305 = vmul.f32 1.0, %v304
    %v306 = vrcp.pop %v295
    %v307 = vmul.f32 1.0, %v306
    %v308 = vrcp.pop %v296
    %v309 = vmul.f32 1.0, %v308
    %v310 = vrcp.pop %v297
    %v311 = vmul.f32 1.0, %v310
    %v312 = vrcp.pop %v298
    %v313 = vmul.f32 1.0, %v312
    %v314 = vrcp.pop %v299
    %v315 = vmul.f32 1.0, %v314
    %v316 = vmul.f32 %v92, %v100
    %v317 = vmul.f32 %v93, %v101
    %v318 = vmul.f32 %v94, %v102
    %v319 = vmul.f32 %v95, %v103
    %v320 = vmul.f32 %v96, %v104
    %v321 = vmul.f32 %v97, %v105
    %v322 = vmul.f32 %v98, %v106
    %v323 = vmul.f32 %v99, %v107
    %324 = vadd.xlane.f32.xlu0 %v316
    %v325 = vpop.xlane.xlu0 %324
    %326 = vadd.xlane.f32.xlu0 %v317
    %v327 = vpop.xlane.xlu0 %326
    %328 = vadd.xlane.f32.xlu0 %v318
    %v329 = vpop.xlane.xlu0 %328
    %330 = vadd.xlane.f32.xlu0 %v319
    %v331 = vpop.xlane.xlu0 %330
    %332 = vadd.xlane.f32.xlu0 %v320
    %v333 = vpop.xlane.xlu0 %332
    %334 = vadd.xlane.f32.xlu0 %v321
    %v335 = vpop.xlane.xlu0 %334
    %336 = vadd.xlane.f32.xlu0 %v322
    %v337 = vpop.xlane.xlu0 %336
    %338 = vadd.xlane.f32.xlu0 %v323
    %v339 = vpop.xlane.xlu0 %338
    %v340 = vmul.f32 %v325, %v197
    %v341 = vmul.f32 %v327, %v199
    %v342 = vmul.f32 %v329, %v201
    %v343 = vmul.f32 %v331, %v203
    %v344 = vmul.f32 %v333, %v205
    %v345 = vmul.f32 %v335, %v207
    %v346 = vmul.f32 %v337, %v209
    %v347 = vmul.f32 %v339, %v211
    %v348 = vmul.f32 %v340, %v301
    %v349 = vmul.f32 %v341, %v303
    %v350 = vmul.f32 %v342, %v305
    %v351 = vmul.f32 %v343, %v307
    %v352 = vmul.f32 %v344, %v309
    %v353 = vmul.f32 %v345, %v311
    %v354 = vmul.f32 %v346, %v313
    %v355 = vmul.f32 %v347, %v315
    %v356 = vsub.f32 0.0, %v348
    %v357 = vsub.f32 0.0, %v349
    %v358 = vsub.f32 0.0, %v350
    %v359 = vsub.f32 0.0, %v351
    %v360 = vsub.f32 0.0, %v352
    %v361 = vsub.f32 0.0, %v353
    %v362 = vsub.f32 0.0, %v354
    %v363 = vsub.f32 0.0, %v355
    %v364 = vmul.f32 %v356, 2.0
    %v365 = vmul.f32 %v357, 2.0
    %v366 = vmul.f32 %v358, 2.0
    %v367 = vmul.f32 %v359, 2.0
    %v368 = vmul.f32 %v360, 2.0
    %v369 = vmul.f32 %v361, 2.0
    %v370 = vmul.f32 %v362, 2.0
    %v371 = vmul.f32 %v363, 2.0
    %v372 = vmul.f32 %v364, 1.442695
    %v373 = vpow.pop %v372
    %v374 = vmul.f32 %v365, 1.442695
    %v375 = vpow.pop %v374
    %v376 = vmul.f32 %v366, 1.442695
    %v377 = vpow.pop %v376
    %v378 = vmul.f32 %v367, 1.442695
    %v379 = vpow.pop %v378
    %v380 = vmul.f32 %v368, 1.442695
    %v381 = vpow.pop %v380
    %v382 = vmul.f32 %v369, 1.442695
    %v383 = vpow.pop %v382
    %v384 = vmul.f32 %v370, 1.442695
    %v385 = vpow.pop %v384
    %v386 = vmul.f32 %v371, 1.442695
    %v387 = vpow.pop %v386
    %vm388 = vcmask 7168
    %389 = vst.msk [vmem:[%s6] sm:$0xff] %vm388, %v373
    %390 = vst.msk [vmem:[%s6 + $0x8] sm:$0xff] %vm388, %v375
    %391 = vst.msk [vmem:[%s6 + $0x10] sm:$0xff] %vm388, %v377
    %392 = vst.msk [vmem:[%s6 + $0x18] sm:$0xff] %vm388, %v379
    %393 = vst.msk [vmem:[%s6 + $0x20] sm:$0xff] %vm388, %v381
    %394 = vst.msk [vmem:[%s6 + $0x28] sm:$0xff] %vm388, %v383
    %395 = vst.msk [vmem:[%s6 + $0x30] sm:$0xff] %vm388, %v385
    %396 = vst.msk [vmem:[%s6 + $0x38] sm:$0xff] %vm388, %v387
    %v397 = vld [vmem:[#allocation6] sm:$0xff]
    %v398 = vld [vmem:[#allocation6 + $0x8] sm:$0xff]
    %v399 = vld [vmem:[#allocation6 + $0x10] sm:$0xff]
    %v400 = vld [vmem:[#allocation6 + $0x18] sm:$0xff]
    %v401 = vld [vmem:[#allocation6 + $0x20] sm:$0xff]
    %v402 = vld [vmem:[#allocation6 + $0x28] sm:$0xff]
    %v403 = vld [vmem:[#allocation6 + $0x30] sm:$0xff]
    %v404 = vld [vmem:[#allocation6 + $0x38] sm:$0xff]
    %v405 = vld [vmem:[#allocation7] sm:$0xff]
    %v406 = vld [vmem:[#allocation7 + $0x8] sm:$0xff]
    %v407 = vld [vmem:[#allocation7 + $0x10] sm:$0xff]
    %v408 = vld [vmem:[#allocation7 + $0x18] sm:$0xff]
    %v409 = vld [vmem:[#allocation7 + $0x20] sm:$0xff]
    %v410 = vld [vmem:[#allocation7 + $0x28] sm:$0xff]
    %v411 = vld [vmem:[#allocation7 + $0x30] sm:$0xff]
    %v412 = vld [vmem:[#allocation7 + $0x38] sm:$0xff]
    %v413 = vld [vmem:[#allocation9] sm:$0xff]
    %v414 = vld [vmem:[#allocation9 + $0x8] sm:$0xff]
    %v415 = vld [vmem:[#allocation9 + $0x10] sm:$0xff]
    %v416 = vld [vmem:[#allocation9 + $0x18] sm:$0xff]
    %v417 = vld [vmem:[#allocation9 + $0x20] sm:$0xff]
    %v418 = vld [vmem:[#allocation9 + $0x28] sm:$0xff]
    %v419 = vld [vmem:[#allocation9 + $0x30] sm:$0xff]
    %v420 = vld [vmem:[#allocation9 + $0x38] sm:$0xff]
    %v421 = vmul.f32 %v397, %v397
    %v422 = vmul.f32 %v398, %v398
    %v423 = vmul.f32 %v399, %v399
    %v424 = vmul.f32 %v400, %v400
    %v425 = vmul.f32 %v401, %v401
    %v426 = vmul.f32 %v402, %v402
    %v427 = vmul.f32 %v403, %v403
    %v428 = vmul.f32 %v404, %v404
    %429 = vadd.xlane.f32.xlu0 %v421
    %v430 = vpop.xlane.xlu0 %429
    %431 = vadd.xlane.f32.xlu0 %v422
    %v432 = vpop.xlane.xlu0 %431
    %433 = vadd.xlane.f32.xlu0 %v423
    %v434 = vpop.xlane.xlu0 %433
    %435 = vadd.xlane.f32.xlu0 %v424
    %v436 = vpop.xlane.xlu0 %435
    %437 = vadd.xlane.f32.xlu0 %v425
    %v438 = vpop.xlane.xlu0 %437
    %439 = vadd.xlane.f32.xlu0 %v426
    %v440 = vpop.xlane.xlu0 %439
    %441 = vadd.xlane.f32.xlu0 %v427
    %v442 = vpop.xlane.xlu0 %441
    %443 = vadd.xlane.f32.xlu0 %v428
    %v444 = vpop.xlane.xlu0 %443
    %v445 = vrsqrt.pop %v430
    %v446 = vmul.f32 %v430, %v445
    %vm447 = vcmp.eq.f32.partialorder %v430, inf
    %v448 = vsel %vm447, %v430, %v446
    %vm449 = vcmp.eq.f32.partialorder %v430, 0.0
    %v450 = vand.u32 %v430, 2147483648
    %v451 = vsel %vm449, %v450, %v448
    %v452 = vrsqrt.pop %v432
    %v453 = vmul.f32 %v432, %v452
    %vm454 = vcmp.eq.f32.partialorder %v432, inf
    %v455 = vsel %vm454, %v432, %v453
    %vm456 = vcmp.eq.f32.partialorder %v432, 0.0
    %v457 = vand.u32 %v432, 2147483648
    %v458 = vsel %vm456, %v457, %v455
    %v459 = vrsqrt.pop %v434
    %v460 = vmul.f32 %v434, %v459
    %vm461 = vcmp.eq.f32.partialorder %v434, inf
    %v462 = vsel %vm461, %v434, %v460
    %vm463 = vcmp.eq.f32.partialorder %v434, 0.0
    %v464 = vand.u32 %v434, 2147483648
    %v465 = vsel %vm463, %v464, %v462
    %v466 = vrsqrt.pop %v436
    %v467 = vmul.f32 %v436, %v466
    %vm468 = vcmp.eq.f32.partialorder %v436, inf
    %v469 = vsel %vm468, %v436, %v467
    %vm470 = vcmp.eq.f32.partialorder %v436, 0.0
    %v471 = vand.u32 %v436, 2147483648
    %v472 = vsel %vm470, %v471, %v469
    %v473 = vrsqrt.pop %v438
    %v474 = vmul.f32 %v438, %v473
    %vm475 = vcmp.eq.f32.partialorder %v438, inf
    %v476 = vsel %vm475, %v438, %v474
    %vm477 = vcmp.eq.f32.partialorder %v438, 0.0
    %v478 = vand.u32 %v438, 2147483648
    %v479 = vsel %vm477, %v478, %v476
    %v480 = vrsqrt.pop %v440
    %v481 = vmul.f32 %v440, %v480
    %vm482 = vcmp.eq.f32.partialorder %v440, inf
    %v483 = vsel %vm482, %v440, %v481
    %vm484 = vcmp.eq.f32.partialorder %v440, 0.0
    %v485 = vand.u32 %v440, 2147483648
    %v486 = vsel %vm484, %v485, %v483
    %v487 = vrsqrt.pop %v442
    %v488 = vmul.f32 %v442, %v487
    %vm489 = vcmp.eq.f32.partialorder %v442, inf
    %v490 = vsel %vm489, %v442, %v488
    %vm491 = vcmp.eq.f32.partialorder %v442, 0.0
    %v492 = vand.u32 %v442, 2147483648
    %v493 = vsel %vm491, %v492, %v490
    %v494 = vrsqrt.pop %v444
    %v495 = vmul.f32 %v444, %v494
    %vm496 = vcmp.eq.f32.partialorder %v444, inf
    %v497 = vsel %vm496, %v444, %v495
    %vm498 = vcmp.eq.f32.partialorder %v444, 0.0
    %v499 = vand.u32 %v444, 2147483648
    %v500 = vsel %vm498, %v499, %v497
    %v501 = vmax.f32 %v451, 1e-12
    %v502 = vmax.f32 %v458, 1e-12
    %v503 = vmax.f32 %v465, 1e-12
    %v504 = vmax.f32 %v472, 1e-12
    %v505 = vmax.f32 %v479, 1e-12
    %v506 = vmax.f32 %v486, 1e-12
    %v507 = vmax.f32 %v493, 1e-12
    %v508 = vmax.f32 %v500, 1e-12
    %v509 = vrcp.pop %v501
    %v510 = vmul.f32 1.0, %v509
    %v511 = vrcp.pop %v502
    %v512 = vmul.f32 1.0, %v511
    %v513 = vrcp.pop %v503
    %v514 = vmul.f32 1.0, %v513
    %v515 = vrcp.pop %v504
    %v516 = vmul.f32 1.0, %v515
    %v517 = vrcp.pop %v505
    %v518 = vmul.f32 1.0, %v517
    %v519 = vrcp.pop %v506
    %v520 = vmul.f32 1.0, %v519
    %v521 = vrcp.pop %v507
    %v522 = vmul.f32 1.0, %v521
    %v523 = vrcp.pop %v508
    %v524 = vmul.f32 1.0, %v523
    %v525 = vmul.f32 %v92, %v397
    %v526 = vmul.f32 %v93, %v398
    %v527 = vmul.f32 %v94, %v399
    %v528 = vmul.f32 %v95, %v400
    %v529 = vmul.f32 %v96, %v401
    %v530 = vmul.f32 %v97, %v402
    %v531 = vmul.f32 %v98, %v403
    %v532 = vmul.f32 %v99, %v404
    %533 = vadd.xlane.f32.xlu0 %v525
    %v534 = vpop.xlane.xlu0 %533
    %535 = vadd.xlane.f32.xlu0 %v526
    %v536 = vpop.xlane.xlu0 %535
    %537 = vadd.xlane.f32.xlu0 %v527
    %v538 = vpop.xlane.xlu0 %537
    %539 = vadd.xlane.f32.xlu0 %v528
    %v540 = vpop.xlane.xlu0 %539
    %541 = vadd.xlane.f32.xlu0 %v529
    %v542 = vpop.xlane.xlu0 %541
    %543 = vadd.xlane.f32.xlu0 %v530
    %v544 = vpop.xlane.xlu0 %543
    %545 = vadd.xlane.f32.xlu0 %v531
    %v546 = vpop.xlane.xlu0 %545
    %547 = vadd.xlane.f32.xlu0 %v532
    %v548 = vpop.xlane.xlu0 %547
    %v549 = vmul.f32 %v197, %v510
    %v550 = vmul.f32 %v199, %v512
    %v551 = vmul.f32 %v201, %v514
    %v552 = vmul.f32 %v203, %v516
    %v553 = vmul.f32 %v205, %v518
    %v554 = vmul.f32 %v207, %v520
    %v555 = vmul.f32 %v209, %v522
    %v556 = vmul.f32 %v211, %v524
    %v557 = vmul.f32 %v534, %v549
    %v558 = vmul.f32 %v536, %v550
    %v559 = vmul.f32 %v538, %v551
    %v560 = vmul.f32 %v540, %v552
    %v561 = vmul.f32 %v542, %v553
    %v562 = vmul.f32 %v544, %v554
    %v563 = vmul.f32 %v546, %v555
    %v564 = vmul.f32 %v548, %v556
    %v565 = vmul.f32 %v557, 2.0
    %v566 = vmul.f32 %v558, 2.0
    %v567 = vmul.f32 %v559, 2.0
    %v568 = vmul.f32 %v560, 2.0
    %v569 = vmul.f32 %v561, 2.0
    %v570 = vmul.f32 %v562, 2.0
    %v571 = vmul.f32 %v563, 2.0
    %v572 = vmul.f32 %v564, 2.0
    %v573 = vmul.f32 %v565, 1.442695
    %v574 = vpow.pop %v573
    %v575 = vmul.f32 %v566, 1.442695
    %v576 = vpow.pop %v575
    %v577 = vmul.f32 %v567, 1.442695
    %v578 = vpow.pop %v577
    %v579 = vmul.f32 %v568, 1.442695
    %v580 = vpow.pop %v579
    %v581 = vmul.f32 %v569, 1.442695
    %v582 = vpow.pop %v581
    %v583 = vmul.f32 %v570, 1.442695
    %v584 = vpow.pop %v583
    %v585 = vmul.f32 %v571, 1.442695
    %v586 = vpow.pop %v585
    %v587 = vmul.f32 %v572, 1.442695
    %v588 = vpow.pop %v587
    %v589 = vadd.f32 %v574, 0.0
    %v590 = vadd.f32 %v576, 0.0
    %v591 = vadd.f32 %v578, 0.0
    %v592 = vadd.f32 %v580, 0.0
    %v593 = vadd.f32 %v582, 0.0
    %v594 = vadd.f32 %v584, 0.0
    %v595 = vadd.f32 %v586, 0.0
    %v596 = vadd.f32 %v588, 0.0
    %v597 = vmul.f32 %v405, %v405
    %v598 = vmul.f32 %v406, %v406
    %v599 = vmul.f32 %v407, %v407
    %v600 = vmul.f32 %v408, %v408
    %v601 = vmul.f32 %v409, %v409
    %v602 = vmul.f32 %v410, %v410
    %v603 = vmul.f32 %v411, %v411
    %v604 = vmul.f32 %v412, %v412
    %605 = vadd.xlane.f32.xlu0 %v597
    %v606 = vpop.xlane.xlu0 %605
    %607 = vadd.xlane.f32.xlu0 %v598
    %v608 = vpop.xlane.xlu0 %607
    %609 = vadd.xlane.f32.xlu0 %v599
    %v610 = vpop.xlane.xlu0 %609
    %611 = vadd.xlane.f32.xlu0 %v600
    %v612 = vpop.xlane.xlu0 %611
    %613 = vadd.xlane.f32.xlu0 %v601
    %v614 = vpop.xlane.xlu0 %613
    %615 = vadd.xlane.f32.xlu0 %v602
    %v616 = vpop.xlane.xlu0 %615
    %617 = vadd.xlane.f32.xlu0 %v603
    %v618 = vpop.xlane.xlu0 %617
    %619 = vadd.xlane.f32.xlu0 %v604
    %v620 = vpop.xlane.xlu0 %619
    %v621 = vrsqrt.pop %v606
    %v622 = vmul.f32 %v606, %v621
    %vm623 = vcmp.eq.f32.partialorder %v606, inf
    %v624 = vsel %vm623, %v606, %v622
    %vm625 = vcmp.eq.f32.partialorder %v606, 0.0
    %v626 = vand.u32 %v606, 2147483648
    %v627 = vsel %vm625, %v626, %v624
    %v628 = vrsqrt.pop %v608
    %v629 = vmul.f32 %v608, %v628
    %vm630 = vcmp.eq.f32.partialorder %v608, inf
    %v631 = vsel %vm630, %v608, %v629
    %vm632 = vcmp.eq.f32.partialorder %v608, 0.0
    %v633 = vand.u32 %v608, 2147483648
    %v634 = vsel %vm632, %v633, %v631
    %v635 = vrsqrt.pop %v610
    %v636 = vmul.f32 %v610, %v635
    %vm637 = vcmp.eq.f32.partialorder %v610, inf
    %v638 = vsel %vm637, %v610, %v636
    %vm639 = vcmp.eq.f32.partialorder %v610, 0.0
    %v640 = vand.u32 %v610, 2147483648
    %v641 = vsel %vm639, %v640, %v638
    %v642 = vrsqrt.pop %v612
    %v643 = vmul.f32 %v612, %v642
    %vm644 = vcmp.eq.f32.partialorder %v612, inf
    %v645 = vsel %vm644, %v612, %v643
    %vm646 = vcmp.eq.f32.partialorder %v612, 0.0
    %v647 = vand.u32 %v612, 2147483648
    %v648 = vsel %vm646, %v647, %v645
    %v649 = vrsqrt.pop %v614
    %v650 = vmul.f32 %v614, %v649
    %vm651 = vcmp.eq.f32.partialorder %v614, inf
    %v652 = vsel %vm651, %v614, %v650
    %vm653 = vcmp.eq.f32.partialorder %v614, 0.0
    %v654 = vand.u32 %v614, 2147483648
    %v655 = vsel %vm653, %v654, %v652
    %v656 = vrsqrt.pop %v616
    %v657 = vmul.f32 %v616, %v656
    %vm658 = vcmp.eq.f32.partialorder %v616, inf
    %v659 = vsel %vm658, %v616, %v657
    %vm660 = vcmp.eq.f32.partialorder %v616, 0.0
    %v661 = vand.u32 %v616, 2147483648
    %v662 = vsel %vm660, %v661, %v659
    %v663 = vrsqrt.pop %v618
    %v664 = vmul.f32 %v618, %v663
    %vm665 = vcmp.eq.f32.partialorder %v618, inf
    %v666 = vsel %vm665, %v618, %v664
    %vm667 = vcmp.eq.f32.partialorder %v618, 0.0
    %v668 = vand.u32 %v618, 2147483648
    %v669 = vsel %vm667, %v668, %v666
    %v670 = vrsqrt.pop %v620
    %v671 = vmul.f32 %v620, %v670
    %vm672 = vcmp.eq.f32.partialorder %v620, inf
    %v673 = vsel %vm672, %v620, %v671
    %vm674 = vcmp.eq.f32.partialorder %v620, 0.0
    %v675 = vand.u32 %v620, 2147483648
    %v676 = vsel %vm674, %v675, %v673
    %v677 = vmax.f32 %v627, 1e-12
    %v678 = vmax.f32 %v634, 1e-12
    %v679 = vmax.f32 %v641, 1e-12
    %v680 = vmax.f32 %v648, 1e-12
    %v681 = vmax.f32 %v655, 1e-12
    %v682 = vmax.f32 %v662, 1e-12
    %v683 = vmax.f32 %v669, 1e-12
    %v684 = vmax.f32 %v676, 1e-12
    %v685 = vrcp.pop %v677
    %v686 = vmul.f32 1.0, %v685
    %v687 = vrcp.pop %v678
    %v688 = vmul.f32 1.0, %v687
    %v689 = vrcp.pop %v679
    %v690 = vmul.f32 1.0, %v689
    %v691 = vrcp.pop %v680
    %v692 = vmul.f32 1.0, %v691
    %v693 = vrcp.pop %v681
    %v694 = vmul.f32 1.0, %v693
    %v695 = vrcp.pop %v682
    %v696 = vmul.f32 1.0, %v695
    %v697 = vrcp.pop %v683
    %v698 = vmul.f32 1.0, %v697
    %v699 = vrcp.pop %v684
    %v700 = vmul.f32 1.0, %v699
    %v701 = vmul.f32 %v92, %v405
    %v702 = vmul.f32 %v93, %v406
    %v703 = vmul.f32 %v94, %v407
    %v704 = vmul.f32 %v95, %v408
    %v705 = vmul.f32 %v96, %v409
    %v706 = vmul.f32 %v97, %v410
    %v707 = vmul.f32 %v98, %v411
    %v708 = vmul.f32 %v99, %v412
    %709 = vadd.xlane.f32.xlu0 %v701
    %v710 = vpop.xlane.xlu0 %709
    %711 = vadd.xlane.f32.xlu0 %v702
    %v712 = vpop.xlane.xlu0 %711
    %713 = vadd.xlane.f32.xlu0 %v703
    %v714 = vpop.xlane.xlu0 %713
    %715 = vadd.xlane.f32.xlu0 %v704
    %v716 = vpop.xlane.xlu0 %715
    %717 = vadd.xlane.f32.xlu0 %v705
    %v718 = vpop.xlane.xlu0 %717
    %719 = vadd.xlane.f32.xlu0 %v706
    %v720 = vpop.xlane.xlu0 %719
    %721 = vadd.xlane.f32.xlu0 %v707
    %v722 = vpop.xlane.xlu0 %721
    %723 = vadd.xlane.f32.xlu0 %v708
    %v724 = vpop.xlane.xlu0 %723
    %v725 = vmul.f32 %v197, %v686
    %v726 = vmul.f32 %v199, %v688
    %v727 = vmul.f32 %v201, %v690
    %v728 = vmul.f32 %v203, %v692
    %v729 = vmul.f32 %v205, %v694
    %v730 = vmul.f32 %v207, %v696
    %v731 = vmul.f32 %v209, %v698
    %v732 = vmul.f32 %v211, %v700
    %v733 = vmul.f32 %v710, %v725
    %v734 = vmul.f32 %v712, %v726
    %v735 = vmul.f32 %v714, %v727
    %v736 = vmul.f32 %v716, %v728
    %v737 = vmul.f32 %v718, %v729
    %v738 = vmul.f32 %v720, %v730
    %v739 = vmul.f32 %v722, %v731
    %v740 = vmul.f32 %v724, %v732
    %v741 = vmul.f32 %v733, 2.0
    %v742 = vmul.f32 %v734, 2.0
    %v743 = vmul.f32 %v735, 2.0
    %v744 = vmul.f32 %v736, 2.0
    %v745 = vmul.f32 %v737, 2.0
    %v746 = vmul.f32 %v738, 2.0
    %v747 = vmul.f32 %v739, 2.0
    %v748 = vmul.f32 %v740, 2.0
    %v749 = vmul.f32 %v741, 1.442695
    %v750 = vpow.pop %v749
    %v751 = vmul.f32 %v742, 1.442695
    %v752 = vpow.pop %v751
    %v753 = vmul.f32 %v743, 1.442695
    %v754 = vpow.pop %v753
    %v755 = vmul.f32 %v744, 1.442695
    %v756 = vpow.pop %v755
    %v757 = vmul.f32 %v745, 1.442695
    %v758 = vpow.pop %v757
    %v759 = vmul.f32 %v746, 1.442695
    %v760 = vpow.pop %v759
    %v761 = vmul.f32 %v747, 1.442695
    %v762 = vpow.pop %v761
    %v763 = vmul.f32 %v748, 1.442695
    %v764 = vpow.pop %v763
    %v765 = vadd.f32 %v589, %v750
    %v766 = vadd.f32 %v590, %v752
    %v767 = vadd.f32 %v591, %v754
    %v768 = vadd.f32 %v592, %v756
    %v769 = vadd.f32 %v593, %v758
    %v770 = vadd.f32 %v594, %v760
    %v771 = vadd.f32 %v595, %v762
    %v772 = vadd.f32 %v596, %v764
    %v773 = vmul.f32 %v413, %v413
    %v774 = vmul.f32 %v414, %v414
    %v775 = vmul.f32 %v415, %v415
    %v776 = vmul.f32 %v416, %v416
    %v777 = vmul.f32 %v417, %v417
    %v778 = vmul.f32 %v418, %v418
    %v779 = vmul.f32 %v419, %v419
    %v780 = vmul.f32 %v420, %v420
    %781 = vadd.xlane.f32.xlu0 %v773
    %v782 = vpop.xlane.xlu0 %781
    %783 = vadd.xlane.f32.xlu0 %v774
    %v784 = vpop.xlane.xlu0 %783
    %785 = vadd.xlane.f32.xlu0 %v775
    %v786 = vpop.xlane.xlu0 %785
    %787 = vadd.xlane.f32.xlu0 %v776
    %v788 = vpop.xlane.xlu0 %787
    %789 = vadd.xlane.f32.xlu0 %v777
    %v790 = vpop.xlane.xlu0 %789
    %791 = vadd.xlane.f32.xlu0 %v778
    %v792 = vpop.xlane.xlu0 %791
    %793 = vadd.xlane.f32.xlu0 %v779
    %v794 = vpop.xlane.xlu0 %793
    %795 = vadd.xlane.f32.xlu0 %v780
    %v796 = vpop.xlane.xlu0 %795
    %v797 = vrsqrt.pop %v782
    %v798 = vmul.f32 %v782, %v797
    %vm799 = vcmp.eq.f32.partialorder %v782, inf
    %v800 = vsel %vm799, %v782, %v798
    %vm801 = vcmp.eq.f32.partialorder %v782, 0.0
    %v802 = vand.u32 %v782, 2147483648
    %v803 = vsel %vm801, %v802, %v800
    %v804 = vrsqrt.pop %v784
    %v805 = vmul.f32 %v784, %v804
    %vm806 = vcmp.eq.f32.partialorder %v784, inf
    %v807 = vsel %vm806, %v784, %v805
    %vm808 = vcmp.eq.f32.partialorder %v784, 0.0
    %v809 = vand.u32 %v784, 2147483648
    %v810 = vsel %vm808, %v809, %v807
    %v811 = vrsqrt.pop %v786
    %v812 = vmul.f32 %v786, %v811
    %vm813 = vcmp.eq.f32.partialorder %v786, inf
    %v814 = vsel %vm813, %v786, %v812
    %vm815 = vcmp.eq.f32.partialorder %v786, 0.0
    %v816 = vand.u32 %v786, 2147483648
    %v817 = vsel %vm815, %v816, %v814
    %v818 = vrsqrt.pop %v788
    %v819 = vmul.f32 %v788, %v818
    %vm820 = vcmp.eq.f32.partialorder %v788, inf
    %v821 = vsel %vm820, %v788, %v819
    %vm822 = vcmp.eq.f32.partialorder %v788, 0.0
    %v823 = vand.u32 %v788, 2147483648
    %v824 = vsel %vm822, %v823, %v821
    %v825 = vrsqrt.pop %v790
    %v826 = vmul.f32 %v790, %v825
    %vm827 = vcmp.eq.f32.partialorder %v790, inf
    %v828 = vsel %vm827, %v790, %v826
    %vm829 = vcmp.eq.f32.partialorder %v790, 0.0
    %v830 = vand.u32 %v790, 2147483648
    %v831 = vsel %vm829, %v830, %v828
    %v832 = vrsqrt.pop %v792
    %v833 = vmul.f32 %v792, %v832
    %vm834 = vcmp.eq.f32.partialorder %v792, inf
    %v835 = vsel %vm834, %v792, %v833
    %vm836 = vcmp.eq.f32.partialorder %v792, 0.0
    %v837 = vand.u32 %v792, 2147483648
    %v838 = vsel %vm836, %v837, %v835
    %v839 = vrsqrt.pop %v794
    %v840 = vmul.f32 %v794, %v839
    %vm841 = vcmp.eq.f32.partialorder %v794, inf
    %v842 = vsel %vm841, %v794, %v840
    %vm843 = vcmp.eq.f32.partialorder %v794, 0.0
    %v844 = vand.u32 %v794, 2147483648
    %v845 = vsel %vm843, %v844, %v842
    %v846 = vrsqrt.pop %v796
    %v847 = vmul.f32 %v796, %v846
    %vm848 = vcmp.eq.f32.partialorder %v796, inf
    %v849 = vsel %vm848, %v796, %v847
    %vm850 = vcmp.eq.f32.partialorder %v796, 0.0
    %v851 = vand.u32 %v796, 2147483648
    %v852 = vsel %vm850, %v851, %v849
    %v853 = vmax.f32 %v803, 1e-12
    %v854 = vmax.f32 %v810, 1e-12
    %v855 = vmax.f32 %v817, 1e-12
    %v856 = vmax.f32 %v824, 1e-12
    %v857 = vmax.f32 %v831, 1e-12
    %v858 = vmax.f32 %v838, 1e-12
    %v859 = vmax.f32 %v845, 1e-12
    %v860 = vmax.f32 %v852, 1e-12
    %v861 = vrcp.pop %v853
    %v862 = vmul.f32 1.0, %v861
    %v863 = vrcp.pop %v854
    %v864 = vmul.f32 1.0, %v863
    %v865 = vrcp.pop %v855
    %v866 = vmul.f32 1.0, %v865
    %v867 = vrcp.pop %v856
    %v868 = vmul.f32 1.0, %v867
    %v869 = vrcp.pop %v857
    %v870 = vmul.f32 1.0, %v869
    %v871 = vrcp.pop %v858
    %v872 = vmul.f32 1.0, %v871
    %v873 = vrcp.pop %v859
    %v874 = vmul.f32 1.0, %v873
    %v875 = vrcp.pop %v860
    %v876 = vmul.f32 1.0, %v875
    %v877 = vmul.f32 %v92, %v413
    %v878 = vmul.f32 %v93, %v414
    %v879 = vmul.f32 %v94, %v415
    %v880 = vmul.f32 %v95, %v416
    %v881 = vmul.f32 %v96, %v417
    %v882 = vmul.f32 %v97, %v418
    %v883 = vmul.f32 %v98, %v419
    %v884 = vmul.f32 %v99, %v420
    %885 = vadd.xlane.f32.xlu0 %v877
    %v886 = vpop.xlane.xlu0 %885
    %887 = vadd.xlane.f32.xlu0 %v878
    %v888 = vpop.xlane.xlu0 %887
    %889 = vadd.xlane.f32.xlu0 %v879
    %v890 = vpop.xlane.xlu0 %889
    %891 = vadd.xlane.f32.xlu0 %v880
    %v892 = vpop.xlane.xlu0 %891
    %893 = vadd.xlane.f32.xlu0 %v881
    %v894 = vpop.xlane.xlu0 %893
    %895 = vadd.xlane.f32.xlu0 %v882
    %v896 = vpop.xlane.xlu0 %895
    %897 = vadd.xlane.f32.xlu0 %v883
    %v898 = vpop.xlane.xlu0 %897
    %899 = vadd.xlane.f32.xlu0 %v884
    %v900 = vpop.xlane.xlu0 %899
    %v901 = vmul.f32 %v197, %v862
    %v902 = vmul.f32 %v199, %v864
    %v903 = vmul.f32 %v201, %v866
    %v904 = vmul.f32 %v203, %v868
    %v905 = vmul.f32 %v205, %v870
    %v906 = vmul.f32 %v207, %v872
    %v907 = vmul.f32 %v209, %v874
    %v908 = vmul.f32 %v211, %v876
    %v909 = vmul.f32 %v886, %v901
    %v910 = vmul.f32 %v888, %v902
    %v911 = vmul.f32 %v890, %v903
    %v912 = vmul.f32 %v892, %v904
    %v913 = vmul.f32 %v894, %v905
    %v914 = vmul.f32 %v896, %v906
    %v915 = vmul.f32 %v898, %v907
    %v916 = vmul.f32 %v900, %v908
    %v917 = vmul.f32 %v909, 2.0
    %v918 = vmul.f32 %v910, 2.0
    %v919 = vmul.f32 %v911, 2.0
    %v920 = vmul.f32 %v912, 2.0
    %v921 = vmul.f32 %v913, 2.0
    %v922 = vmul.f32 %v914, 2.0
    %v923 = vmul.f32 %v915, 2.0
    %v924 = vmul.f32 %v916, 2.0
    %v925 = vmul.f32 %v917, 1.442695
    %v926 = vpow.pop %v925
    %v927 = vmul.f32 %v918, 1.442695
    %v928 = vpow.pop %v927
    %v929 = vmul.f32 %v919, 1.442695
    %v930 = vpow.pop %v929
    %v931 = vmul.f32 %v920, 1.442695
    %v932 = vpow.pop %v931
    %v933 = vmul.f32 %v921, 1.442695
    %v934 = vpow.pop %v933
    %v935 = vmul.f32 %v922, 1.442695
    %v936 = vpow.pop %v935
    %v937 = vmul.f32 %v923, 1.442695
    %v938 = vpow.pop %v937
    %v939 = vmul.f32 %v924, 1.442695
    %v940 = vpow.pop %v939
    %v941 = vadd.f32 %v765, %v926
    %v942 = vadd.f32 %v766, %v928
    %v943 = vadd.f32 %v767, %v930
    %v944 = vadd.f32 %v768, %v932
    %v945 = vadd.f32 %v769, %v934
    %v946 = vadd.f32 %v770, %v936
    %v947 = vadd.f32 %v771, %v938
    %v948 = vadd.f32 %v772, %v940
    %949 = vst.msk [vmem:[%s5] sm:$0xff] %vm388, %v941
    %950 = vst.msk [vmem:[%s5 + $0x8] sm:$0xff] %vm388, %v942
    %951 = vst.msk [vmem:[%s5 + $0x10] sm:$0xff] %vm388, %v943
    %952 = vst.msk [vmem:[%s5 + $0x18] sm:$0xff] %vm388, %v944
    %953 = vst.msk [vmem:[%s5 + $0x20] sm:$0xff] %vm388, %v945
    %954 = vst.msk [vmem:[%s5 + $0x28] sm:$0xff] %vm388, %v946
    %955 = vst.msk [vmem:[%s5 + $0x30] sm:$0xff] %vm388, %v947
    %956 = vst.msk [vmem:[%s5 + $0x38] sm:$0xff] %vm388, %v948
    // Predicated region
    $region42: #{tpu_custom_call.1} parent=1 // pred_check
      _
    $region43: #{tpu_custom_call.1} parent=1 // pred_check_branch
      %958 = sbr.rel (0) target = $region45
    $region44: #{tpu_custom_call.1} parent=1 // pred_region
      _
    $region45: #{tpu_custom_call.1} parent=1 // pred_fallthru
      _
    // Predicated region
    $region46: #{tpu_custom_call.1} parent=1 // pred_check
      _
    $region47: #{tpu_custom_call.1} parent=1 // pred_check_branch
      %960 = sbr.rel (0) target = $region49
    $region48: #{tpu_custom_call.1} parent=1 // pred_region
      _
    $region49: #{tpu_custom_call.1} parent=1 // pred_fallthru
      _
    // Predicated region
    $region50: #{tpu_custom_call.1} parent=1 // pred_check
      _
    $region51: #{tpu_custom_call.1} parent=1 // pred_check_branch
      %962 = sbr.rel (0) target = $region53
    $region52: #{tpu_custom_call.1} parent=1 // pred_region
      _
    $region53: #{tpu_custom_call.1} parent=1 // pred_fallthru
      _
    // Predicated region
    $region54: #{tpu_custom_call.1} parent=1 // pred_check
      _
    $region55: #{tpu_custom_call.1} parent=1 // pred_check_branch
      %964 = sbr.rel (0) target = $region57
    $region56: #{tpu_custom_call.1} parent=1 // pred_region
      _
    $region57: #{tpu_custom_call.1} parent=1 // pred_fallthru
      _
    %965 = vsyncpa [#allocation3], 1
    %966 = vsyncpa [#allocation5], 1
    %967 = vsyncpa [#allocation8], 1

</llo_original>
